<compile_context>
chip_gen: v7x
topology: tpu7x:2x2x1
jax: 0.10.0
libtpu: 0.0.40
codegen_flags: <defaults>
</compile_context>

<pallas_src>
import jax
import jax.numpy as jnp
from jax.experimental import pallas as pl
from jax.experimental.pallas import tpu as pltpu


def text_lstm_kernel(x_ref, wih_ref, whh_ref, b_ref, wfc_ref, bfc_ref, out_ref):
    SB, _ = x_ref.shape                 # x is (S*Bp, E), time-major row blocks
    H = whh_ref.shape[0]
    Bp = out_ref.shape[0]
    S = SB // Bp

    # Phase 0: input projection for every time step at once (off the serial path).
    # Gate column order (host-side reordered): i | f | o | g.
    xg = (jnp.dot(x_ref[...], wih_ref[...], preferred_element_type=jnp.float32)
          + b_ref[...])                                    # (S*Bp, 4H)

    w_hh = whh_ref[...]                                    # hoisted weight load
    h = jnp.zeros((Bp, H), jnp.float32)
    c = jnp.zeros((Bp, H), jnp.float32)

    # Backward direction (== h_n[1]): walk time in reverse.  S is small & static,
    # so a fully-unrolled loop keeps h/c in vregs; only h @ W_hh is per-step MXU work.
    for t in range(S - 1, -1, -1):
        gates = (xg[t * Bp:(t + 1) * Bp, :]                # sublane-aligned block
                 + jnp.dot(h, w_hh, preferred_element_type=jnp.float32))   # (Bp, 4H)
        sig = jax.nn.sigmoid(gates[:, :3 * H])             # i, f, o in a single pass
        g_g = jnp.tanh(gates[:, 3 * H:])
        i_g = sig[:, :H]
        f_g = sig[:, H:2 * H]
        o_g = sig[:, 2 * H:]
        c = f_g * c + i_g * g_g
        h = o_g * jnp.tanh(c)

    # Final Linear on the backward-direction final hidden state (lane-dense output).
    out_ref[...] = (jnp.dot(h, wfc_ref[...], preferred_element_type=jnp.float32)
                    + bfc_ref[...]).astype(out_ref.dtype)


def _reorder_gate_rows(w):
    """PyTorch LSTM gate-row order (i, f, g, o) -> (i, f, o, g)."""
    H = w.shape[0] // 4
    return jnp.concatenate([w[:2 * H], w[3 * H:], w[2 * H:3 * H]], axis=0)


def text_lstm_forward(token_ids, params):
    """token_ids: (batch, seq) int32 -> (batch, classNum) float32."""
    emb_table = params["embedding"]                        # (vocab, E)
    B, S = token_ids.shape
    assert S >= 1, "empty sequences are not supported (PyTorch LSTM would also fail)"
    E = emb_table.shape[1]
    H = params["w_hh"].shape[1]
    C = params["w_fc"].shape[0]

    Bp = max(8, ((B + 7) // 8) * 8)     # sublane-aligned batch (f32 -> 8 rows)
    Cp = 128                            # lane-dense fc output width

    # Embedding lookup (glue, stays in JAX) -> time-major (S, Bp, E) -> (S*Bp, E)
    # so each time step is a contiguous, sublane-aligned row block in the kernel.
    x = jnp.transpose(emb_table[token_ids], (1, 0, 2)).astype(jnp.float32)  # (S, B, E)
    x = jnp.pad(x, ((0, 0), (0, Bp - B), (0, 0))).reshape(S * Bp, E)

    # Weights: reorder gates to (i, f, o, g) and pre-transpose for row-major matmuls.
    w_ih_t = _reorder_gate_rows(params["w_ih"]).T                      # (E, 4H)
    w_hh_t = _reorder_gate_rows(params["w_hh"]).T                      # (H, 4H)
    bias = _reorder_gate_rows(params["b_ih"] + params["b_hh"]).reshape(1, 4 * H)
    w_fc_t = jnp.pad(params["w_fc"].T, ((0, 0), (0, Cp - C)))          # (H, Cp)
    b_fc = jnp.pad(params["b_fc"], (0, Cp - C)).reshape(1, Cp)

    vmem = pl.BlockSpec(memory_space=pltpu.MemorySpace.VMEM)
    out = pl.pallas_call(
        text_lstm_kernel,
        out_shape=jax.ShapeDtypeStruct((Bp, Cp), jnp.float32),
        in_specs=[vmem, vmem, vmem, vmem, vmem, vmem],
        out_specs=vmem,
    )(x, w_ih_t, w_hh_t, bias, w_fc_t, b_fc)
    return out[:B, :C]


def reference_forward(token_ids, params):
    """Pure-JAX reference of the same math (backward-direction LSTM + fc)."""
    emb = params["embedding"][token_ids]                   # (B, S, E)
    x = jnp.transpose(emb, (1, 0, 2))                      # (S, B, E)
    H = params["w_hh"].shape[1]
    B = x.shape[1]

    def step(carry, x_t):
        h, c = carry
        g = (x_t @ params["w_ih"].T + h @ params["w_hh"].T
             + params["b_ih"] + params["b_hh"])            # PyTorch order i, f, g, o
        i = jax.nn.sigmoid(g[:, 0 * H:1 * H])
        f = jax.nn.sigmoid(g[:, 1 * H:2 * H])
        gg = jnp.tanh(g[:, 2 * H:3 * H])
        o = jax.nn.sigmoid(g[:, 3 * H:4 * H])
        c = f * c + i * gg
        h = o * jnp.tanh(c)
        return (h, c), None

    init = (jnp.zeros((B, H), jnp.float32), jnp.zeros((B, H), jnp.float32))
    (h_bwd, _), _ = jax.lax.scan(step, init, x[::-1])      # reversed time
    return h_bwd @ params["w_fc"].T + params["b_fc"]


if __name__ == "__main__":
    # Small, deterministic config (num_layers=1, dropout has no effect in eval).
    vocab_size, emb_dim, hidden, class_num = 50, 16, 32, 4
    batch, seq = 2, 8

    key = jax.random.PRNGKey(0)
    k = jax.random.split(key, 8)
    s = 1.0 / jnp.sqrt(hidden)
    params = {
        "embedding": jax.random.normal(k[0], (vocab_size, emb_dim), jnp.float32),
        "w_ih": jax.random.uniform(k[1], (4 * hidden, emb_dim), jnp.float32, -s, s),
        "w_hh": jax.random.uniform(k[2], (4 * hidden, hidden), jnp.float32, -s, s),
        "b_ih": jax.random.uniform(k[3], (4 * hidden,), jnp.float32, -s, s),
        "b_hh": jax.random.uniform(k[4], (4 * hidden,), jnp.float32, -s, s),
        "w_fc": jax.random.uniform(k[5], (class_num, hidden), jnp.float32, -s, s),
        "b_fc": jax.random.uniform(k[6], (class_num,), jnp.float32, -s, s),
    }
    # TODO(synk): num_layers > 1 and the unused forward-direction/output sequence are
    # not materialized since fc(h_n[1]) only depends on the layer-0 backward direction.

    token_ids = jax.random.randint(k[7], (batch, seq), 0, vocab_size, jnp.int32)

    out = jax.block_until_ready(text_lstm_forward(token_ids, params))
    ref = reference_forward(token_ids, params)

    assert out.shape == (batch, class_num)
    assert jnp.allclose(out, ref, atol=1e-4, rtol=1e-4)
    print("KERNEL_OK")
</pallas_src>

<mosaic_0001>
module attributes {stable_mosaic.version = 11 : i64} {
  func.func @text_lstm_kernel(%arg0: memref<64x16xf32, #tpu.memory_space<vmem>>, %arg1: memref<16x128xf32, #tpu.memory_space<vmem>>, %arg2: memref<32x128xf32, #tpu.memory_space<vmem>>, %arg3: memref<1x128xf32, #tpu.memory_space<vmem>>, %arg4: memref<32x128xf32, #tpu.memory_space<vmem>>, %arg5: memref<1x128xf32, #tpu.memory_space<vmem>>, %arg6: memref<8x128xf32, #tpu.memory_space<vmem>>) attributes {dimension_semantics = [], scalar_prefetch = 0 : i64, scratch_operands = 0 : i64, tpu.core_type = #tpu.core_type<tc>} {
    %c0 = arith.constant 0 : index
    %c0_0 = arith.constant 0 : index
    %0 = vector.load %arg0[%c0, %c0_0] : memref<64x16xf32, #tpu.memory_space<vmem>>, vector<64x16xf32>
    %c0_1 = arith.constant 0 : index
    %c0_2 = arith.constant 0 : index
    %1 = vector.load %arg1[%c0_1, %c0_2] : memref<16x128xf32, #tpu.memory_space<vmem>>, vector<16x128xf32>
    %cst = arith.constant dense<0.000000e+00> : vector<64x128xf32>
    %2 = tpu.matmul %0, %1, %cst {dimension_numbers = #tpu.dot_dimension_numbers<[1], [0], [0], [1], [0, 0, 1, 1], [], []>} : vector<64x16xf32>, vector<16x128xf32>, vector<64x128xf32> -> vector<64x128xf32>
    %c0_3 = arith.constant 0 : index
    %c0_4 = arith.constant 0 : index
    %3 = vector.load %arg3[%c0_3, %c0_4] : memref<1x128xf32, #tpu.memory_space<vmem>>, vector<1x128xf32>
    %4 = vector.broadcast %3 : vector<1x128xf32> to vector<64x128xf32>
    %5 = arith.addf %2, %4 : vector<64x128xf32>
    %c0_5 = arith.constant 0 : index
    %c0_6 = arith.constant 0 : index
    %6 = vector.load %arg2[%c0_5, %c0_6] : memref<32x128xf32, #tpu.memory_space<vmem>>, vector<32x128xf32>
    %cst_7 = arith.constant 0.000000e+00 : f32
    %7 = vector.broadcast %cst_7 : f32 to vector<8x32xf32>
    %cst_8 = arith.constant 0.000000e+00 : f32
    %8 = vector.broadcast %cst_8 : f32 to vector<8x32xf32>
    %9 = vector.extract_strided_slice %5 {offsets = [56, 0], sizes = [8, 128], strides = [1, 1]} : vector<64x128xf32> to vector<8x128xf32>
    %cst_9 = arith.constant dense<0.000000e+00> : vector<8x128xf32>
    %10 = tpu.matmul %7, %6, %cst_9 {dimension_numbers = #tpu.dot_dimension_numbers<[1], [0], [0], [1], [0, 0, 1, 1], [], []>} : vector<8x32xf32>, vector<32x128xf32>, vector<8x128xf32> -> vector<8x128xf32>
    %11 = arith.addf %9, %10 : vector<8x128xf32>
    %12 = vector.extract_strided_slice %11 {offsets = [0, 0], sizes = [8, 96], strides = [1, 1]} : vector<8x128xf32> to vector<8x96xf32>
    %13 = arith.negf %12 : vector<8x96xf32>
    %14 = math.exp %13 : vector<8x96xf32>
    %cst_10 = arith.constant 1.000000e+00 : f32
    %15 = vector.broadcast %cst_10 : f32 to vector<8x96xf32>
    %16 = arith.addf %15, %14 : vector<8x96xf32>
    %17 = arith.divf %15, %16 : vector<8x96xf32>
    %18 = vector.extract_strided_slice %11 {offsets = [0, 96], sizes = [8, 32], strides = [1, 1]} : vector<8x128xf32> to vector<8x32xf32>
    %19 = math.tanh %18 : vector<8x32xf32>
    %20 = vector.extract_strided_slice %17 {offsets = [0, 0], sizes = [8, 32], strides = [1, 1]} : vector<8x96xf32> to vector<8x32xf32>
    %21 = vector.extract_strided_slice %17 {offsets = [0, 32], sizes = [8, 32], strides = [1, 1]} : vector<8x96xf32> to vector<8x32xf32>
    %22 = vector.extract_strided_slice %17 {offsets = [0, 64], sizes = [8, 32], strides = [1, 1]} : vector<8x96xf32> to vector<8x32xf32>
    %23 = arith.mulf %21, %8 : vector<8x32xf32>
    %24 = arith.mulf %20, %19 : vector<8x32xf32>
    %25 = arith.addf %23, %24 : vector<8x32xf32>
    %26 = math.tanh %25 : vector<8x32xf32>
    %27 = arith.mulf %22, %26 : vector<8x32xf32>
    %28 = vector.extract_strided_slice %5 {offsets = [48, 0], sizes = [8, 128], strides = [1, 1]} : vector<64x128xf32> to vector<8x128xf32>
    %cst_11 = arith.constant dense<0.000000e+00> : vector<8x128xf32>
    %29 = tpu.matmul %27, %6, %cst_11 {dimension_numbers = #tpu.dot_dimension_numbers<[1], [0], [0], [1], [0, 0, 1, 1], [], []>} : vector<8x32xf32>, vector<32x128xf32>, vector<8x128xf32> -> vector<8x128xf32>
    %30 = arith.addf %28, %29 : vector<8x128xf32>
    %31 = vector.extract_strided_slice %30 {offsets = [0, 0], sizes = [8, 96], strides = [1, 1]} : vector<8x128xf32> to vector<8x96xf32>
    %32 = arith.negf %31 : vector<8x96xf32>
    %33 = math.exp %32 : vector<8x96xf32>
    %cst_12 = arith.constant 1.000000e+00 : f32
    %34 = vector.broadcast %cst_12 : f32 to vector<8x96xf32>
    %35 = arith.addf %34, %33 : vector<8x96xf32>
    %36 = arith.divf %34, %35 : vector<8x96xf32>
    %37 = vector.extract_strided_slice %30 {offsets = [0, 96], sizes = [8, 32], strides = [1, 1]} : vector<8x128xf32> to vector<8x32xf32>
    %38 = math.tanh %37 : vector<8x32xf32>
    %39 = vector.extract_strided_slice %36 {offsets = [0, 0], sizes = [8, 32], strides = [1, 1]} : vector<8x96xf32> to vector<8x32xf32>
    %40 = vector.extract_strided_slice %36 {offsets = [0, 32], sizes = [8, 32], strides = [1, 1]} : vector<8x96xf32> to vector<8x32xf32>
    %41 = vector.extract_strided_slice %36 {offsets = [0, 64], sizes = [8, 32], strides = [1, 1]} : vector<8x96xf32> to vector<8x32xf32>
    %42 = arith.mulf %40, %25 : vector<8x32xf32>
    %43 = arith.mulf %39, %38 : vector<8x32xf32>
    %44 = arith.addf %42, %43 : vector<8x32xf32>
    %45 = math.tanh %44 : vector<8x32xf32>
    %46 = arith.mulf %41, %45 : vector<8x32xf32>
    %47 = vector.extract_strided_slice %5 {offsets = [40, 0], sizes = [8, 128], strides = [1, 1]} : vector<64x128xf32> to vector<8x128xf32>
    %cst_13 = arith.constant dense<0.000000e+00> : vector<8x128xf32>
    %48 = tpu.matmul %46, %6, %cst_13 {dimension_numbers = #tpu.dot_dimension_numbers<[1], [0], [0], [1], [0, 0, 1, 1], [], []>} : vector<8x32xf32>, vector<32x128xf32>, vector<8x128xf32> -> vector<8x128xf32>
    %49 = arith.addf %47, %48 : vector<8x128xf32>
    %50 = vector.extract_strided_slice %49 {offsets = [0, 0], sizes = [8, 96], strides = [1, 1]} : vector<8x128xf32> to vector<8x96xf32>
    %51 = arith.negf %50 : vector<8x96xf32>
    %52 = math.exp %51 : vector<8x96xf32>
    %cst_14 = arith.constant 1.000000e+00 : f32
    %53 = vector.broadcast %cst_14 : f32 to vector<8x96xf32>
    %54 = arith.addf %53, %52 : vector<8x96xf32>
    %55 = arith.divf %53, %54 : vector<8x96xf32>
    %56 = vector.extract_strided_slice %49 {offsets = [0, 96], sizes = [8, 32], strides = [1, 1]} : vector<8x128xf32> to vector<8x32xf32>
    %57 = math.tanh %56 : vector<8x32xf32>
    %58 = vector.extract_strided_slice %55 {offsets = [0, 0], sizes = [8, 32], strides = [1, 1]} : vector<8x96xf32> to vector<8x32xf32>
    %59 = vector.extract_strided_slice %55 {offsets = [0, 32], sizes = [8, 32], strides = [1, 1]} : vector<8x96xf32> to vector<8x32xf32>
    %60 = vector.extract_strided_slice %55 {offsets = [0, 64], sizes = [8, 32], strides = [1, 1]} : vector<8x96xf32> to vector<8x32xf32>
    %61 = arith.mulf %59, %44 : vector<8x32xf32>
    %62 = arith.mulf %58, %57 : vector<8x32xf32>
    %63 = arith.addf %61, %62 : vector<8x32xf32>
    %64 = math.tanh %63 : vector<8x32xf32>
    %65 = arith.mulf %60, %64 : vector<8x32xf32>
    %66 = vector.extract_strided_slice %5 {offsets = [32, 0], sizes = [8, 128], strides = [1, 1]} : vector<64x128xf32> to vector<8x128xf32>
    %cst_15 = arith.constant dense<0.000000e+00> : vector<8x128xf32>
    %67 = tpu.matmul %65, %6, %cst_15 {dimension_numbers = #tpu.dot_dimension_numbers<[1], [0], [0], [1], [0, 0, 1, 1], [], []>} : vector<8x32xf32>, vector<32x128xf32>, vector<8x128xf32> -> vector<8x128xf32>
    %68 = arith.addf %66, %67 : vector<8x128xf32>
    %69 = vector.extract_strided_slice %68 {offsets = [0, 0], sizes = [8, 96], strides = [1, 1]} : vector<8x128xf32> to vector<8x96xf32>
    %70 = arith.negf %69 : vector<8x96xf32>
    %71 = math.exp %70 : vector<8x96xf32>
    %cst_16 = arith.constant 1.000000e+00 : f32
    %72 = vector.broadcast %cst_16 : f32 to vector<8x96xf32>
    %73 = arith.addf %72, %71 : vector<8x96xf32>
    %74 = arith.divf %72, %73 : vector<8x96xf32>
    %75 = vector.extract_strided_slice %68 {offsets = [0, 96], sizes = [8, 32], strides = [1, 1]} : vector<8x128xf32> to vector<8x32xf32>
    %76 = math.tanh %75 : vector<8x32xf32>
    %77 = vector.extract_strided_slice %74 {offsets = [0, 0], sizes = [8, 32], strides = [1, 1]} : vector<8x96xf32> to vector<8x32xf32>
    %78 = vector.extract_strided_slice %74 {offsets = [0, 32], sizes = [8, 32], strides = [1, 1]} : vector<8x96xf32> to vector<8x32xf32>
    %79 = vector.extract_strided_slice %74 {offsets = [0, 64], sizes = [8, 32], strides = [1, 1]} : vector<8x96xf32> to vector<8x32xf32>
    %80 = arith.mulf %78, %63 : vector<8x32xf32>
    %81 = arith.mulf %77, %76 : vector<8x32xf32>
    %82 = arith.addf %80, %81 : vector<8x32xf32>
    %83 = math.tanh %82 : vector<8x32xf32>
    %84 = arith.mulf %79, %83 : vector<8x32xf32>
    %85 = vector.extract_strided_slice %5 {offsets = [24, 0], sizes = [8, 128], strides = [1, 1]} : vector<64x128xf32> to vector<8x128xf32>
    %cst_17 = arith.constant dense<0.000000e+00> : vector<8x128xf32>
    %86 = tpu.matmul %84, %6, %cst_17 {dimension_numbers = #tpu.dot_dimension_numbers<[1], [0], [0], [1], [0, 0, 1, 1], [], []>} : vector<8x32xf32>, vector<32x128xf32>, vector<8x128xf32> -> vector<8x128xf32>
    %87 = arith.addf %85, %86 : vector<8x128xf32>
    %88 = vector.extract_strided_slice %87 {offsets = [0, 0], sizes = [8, 96], strides = [1, 1]} : vector<8x128xf32> to vector<8x96xf32>
    %89 = arith.negf %88 : vector<8x96xf32>
    %90 = math.exp %89 : vector<8x96xf32>
    %cst_18 = arith.constant 1.000000e+00 : f32
    %91 = vector.broadcast %cst_18 : f32 to vector<8x96xf32>
    %92 = arith.addf %91, %90 : vector<8x96xf32>
    %93 = arith.divf %91, %92 : vector<8x96xf32>
    %94 = vector.extract_strided_slice %87 {offsets = [0, 96], sizes = [8, 32], strides = [1, 1]} : vector<8x128xf32> to vector<8x32xf32>
    %95 = math.tanh %94 : vector<8x32xf32>
    %96 = vector.extract_strided_slice %93 {offsets = [0, 0], sizes = [8, 32], strides = [1, 1]} : vector<8x96xf32> to vector<8x32xf32>
    %97 = vector.extract_strided_slice %93 {offsets = [0, 32], sizes = [8, 32], strides = [1, 1]} : vector<8x96xf32> to vector<8x32xf32>
    %98 = vector.extract_strided_slice %93 {offsets = [0, 64], sizes = [8, 32], strides = [1, 1]} : vector<8x96xf32> to vector<8x32xf32>
    %99 = arith.mulf %97, %82 : vector<8x32xf32>
    %100 = arith.mulf %96, %95 : vector<8x32xf32>
    %101 = arith.addf %99, %100 : vector<8x32xf32>
    %102 = math.tanh %101 : vector<8x32xf32>
    %103 = arith.mulf %98, %102 : vector<8x32xf32>
    %104 = vector.extract_strided_slice %5 {offsets = [16, 0], sizes = [8, 128], strides = [1, 1]} : vector<64x128xf32> to vector<8x128xf32>
    %cst_19 = arith.constant dense<0.000000e+00> : vector<8x128xf32>
    %105 = tpu.matmul %103, %6, %cst_19 {dimension_numbers = #tpu.dot_dimension_numbers<[1], [0], [0], [1], [0, 0, 1, 1], [], []>} : vector<8x32xf32>, vector<32x128xf32>, vector<8x128xf32> -> vector<8x128xf32>
    %106 = arith.addf %104, %105 : vector<8x128xf32>
    %107 = vector.extract_strided_slice %106 {offsets = [0, 0], sizes = [8, 96], strides = [1, 1]} : vector<8x128xf32> to vector<8x96xf32>
    %108 = arith.negf %107 : vector<8x96xf32>
    %109 = math.exp %108 : vector<8x96xf32>
    %cst_20 = arith.constant 1.000000e+00 : f32
    %110 = vector.broadcast %cst_20 : f32 to vector<8x96xf32>
    %111 = arith.addf %110, %109 : vector<8x96xf32>
    %112 = arith.divf %110, %111 : vector<8x96xf32>
    %113 = vector.extract_strided_slice %106 {offsets = [0, 96], sizes = [8, 32], strides = [1, 1]} : vector<8x128xf32> to vector<8x32xf32>
    %114 = math.tanh %113 : vector<8x32xf32>
    %115 = vector.extract_strided_slice %112 {offsets = [0, 0], sizes = [8, 32], strides = [1, 1]} : vector<8x96xf32> to vector<8x32xf32>
    %116 = vector.extract_strided_slice %112 {offsets = [0, 32], sizes = [8, 32], strides = [1, 1]} : vector<8x96xf32> to vector<8x32xf32>
    %117 = vector.extract_strided_slice %112 {offsets = [0, 64], sizes = [8, 32], strides = [1, 1]} : vector<8x96xf32> to vector<8x32xf32>
    %118 = arith.mulf %116, %101 : vector<8x32xf32>
    %119 = arith.mulf %115, %114 : vector<8x32xf32>
    %120 = arith.addf %118, %119 : vector<8x32xf32>
    %121 = math.tanh %120 : vector<8x32xf32>
    %122 = arith.mulf %117, %121 : vector<8x32xf32>
    %123 = vector.extract_strided_slice %5 {offsets = [8, 0], sizes = [8, 128], strides = [1, 1]} : vector<64x128xf32> to vector<8x128xf32>
    %cst_21 = arith.constant dense<0.000000e+00> : vector<8x128xf32>
    %124 = tpu.matmul %122, %6, %cst_21 {dimension_numbers = #tpu.dot_dimension_numbers<[1], [0], [0], [1], [0, 0, 1, 1], [], []>} : vector<8x32xf32>, vector<32x128xf32>, vector<8x128xf32> -> vector<8x128xf32>
    %125 = arith.addf %123, %124 : vector<8x128xf32>
    %126 = vector.extract_strided_slice %125 {offsets = [0, 0], sizes = [8, 96], strides = [1, 1]} : vector<8x128xf32> to vector<8x96xf32>
    %127 = arith.negf %126 : vector<8x96xf32>
    %128 = math.exp %127 : vector<8x96xf32>
    %cst_22 = arith.constant 1.000000e+00 : f32
    %129 = vector.broadcast %cst_22 : f32 to vector<8x96xf32>
    %130 = arith.addf %129, %128 : vector<8x96xf32>
    %131 = arith.divf %129, %130 : vector<8x96xf32>
    %132 = vector.extract_strided_slice %125 {offsets = [0, 96], sizes = [8, 32], strides = [1, 1]} : vector<8x128xf32> to vector<8x32xf32>
    %133 = math.tanh %132 : vector<8x32xf32>
    %134 = vector.extract_strided_slice %131 {offsets = [0, 0], sizes = [8, 32], strides = [1, 1]} : vector<8x96xf32> to vector<8x32xf32>
    %135 = vector.extract_strided_slice %131 {offsets = [0, 32], sizes = [8, 32], strides = [1, 1]} : vector<8x96xf32> to vector<8x32xf32>
    %136 = vector.extract_strided_slice %131 {offsets = [0, 64], sizes = [8, 32], strides = [1, 1]} : vector<8x96xf32> to vector<8x32xf32>
    %137 = arith.mulf %135, %120 : vector<8x32xf32>
    %138 = arith.mulf %134, %133 : vector<8x32xf32>
    %139 = arith.addf %137, %138 : vector<8x32xf32>
    %140 = math.tanh %139 : vector<8x32xf32>
    %141 = arith.mulf %136, %140 : vector<8x32xf32>
    %142 = vector.extract_strided_slice %5 {offsets = [0, 0], sizes = [8, 128], strides = [1, 1]} : vector<64x128xf32> to vector<8x128xf32>
    %cst_23 = arith.constant dense<0.000000e+00> : vector<8x128xf32>
    %143 = tpu.matmul %141, %6, %cst_23 {dimension_numbers = #tpu.dot_dimension_numbers<[1], [0], [0], [1], [0, 0, 1, 1], [], []>} : vector<8x32xf32>, vector<32x128xf32>, vector<8x128xf32> -> vector<8x128xf32>
    %144 = arith.addf %142, %143 : vector<8x128xf32>
    %145 = vector.extract_strided_slice %144 {offsets = [0, 0], sizes = [8, 96], strides = [1, 1]} : vector<8x128xf32> to vector<8x96xf32>
    %146 = arith.negf %145 : vector<8x96xf32>
    %147 = math.exp %146 : vector<8x96xf32>
    %cst_24 = arith.constant 1.000000e+00 : f32
    %148 = vector.broadcast %cst_24 : f32 to vector<8x96xf32>
    %149 = arith.addf %148, %147 : vector<8x96xf32>
    %150 = arith.divf %148, %149 : vector<8x96xf32>
    %151 = vector.extract_strided_slice %144 {offsets = [0, 96], sizes = [8, 32], strides = [1, 1]} : vector<8x128xf32> to vector<8x32xf32>
    %152 = math.tanh %151 : vector<8x32xf32>
    %153 = vector.extract_strided_slice %150 {offsets = [0, 0], sizes = [8, 32], strides = [1, 1]} : vector<8x96xf32> to vector<8x32xf32>
    %154 = vector.extract_strided_slice %150 {offsets = [0, 32], sizes = [8, 32], strides = [1, 1]} : vector<8x96xf32> to vector<8x32xf32>
    %155 = vector.extract_strided_slice %150 {offsets = [0, 64], sizes = [8, 32], strides = [1, 1]} : vector<8x96xf32> to vector<8x32xf32>
    %156 = arith.mulf %154, %139 : vector<8x32xf32>
    %157 = arith.mulf %153, %152 : vector<8x32xf32>
    %158 = arith.addf %156, %157 : vector<8x32xf32>
    %159 = math.tanh %158 : vector<8x32xf32>
    %160 = arith.mulf %155, %159 : vector<8x32xf32>
    %c0_25 = arith.constant 0 : index
    %c0_26 = arith.constant 0 : index
    %161 = vector.load %arg4[%c0_25, %c0_26] : memref<32x128xf32, #tpu.memory_space<vmem>>, vector<32x128xf32>
    %cst_27 = arith.constant dense<0.000000e+00> : vector<8x128xf32>
    %162 = tpu.matmul %160, %161, %cst_27 {dimension_numbers = #tpu.dot_dimension_numbers<[1], [0], [0], [1], [0, 0, 1, 1], [], []>} : vector<8x32xf32>, vector<32x128xf32>, vector<8x128xf32> -> vector<8x128xf32>
    %c0_28 = arith.constant 0 : index
    %c0_29 = arith.constant 0 : index
    %163 = vector.load %arg5[%c0_28, %c0_29] : memref<1x128xf32, #tpu.memory_space<vmem>>, vector<1x128xf32>
    %164 = vector.broadcast %163 : vector<1x128xf32> to vector<8x128xf32>
    %165 = arith.addf %162, %164 : vector<8x128xf32>
    %c0_30 = arith.constant 0 : index
    %c0_31 = arith.constant 0 : index
    %166 = vector.load %arg6[%c0_30, %c0_31] : memref<8x128xf32, #tpu.memory_space<vmem>>, vector<8x128xf32>
    tpu.vector_store %arg6[%c0_30, %c0_31], %165 {strides = array<i32>} : memref<8x128xf32, #tpu.memory_space<vmem>>, vector<8x128xf32>,
    return
  }
}

</mosaic_0001>

<llo_original>
// kernel: tpu_custom_call.1
$region0: #{tpu_custom_call.1}
  #allocation0 [shape = 'u32[]', space=smem, size = 0x4, offset = 0x4, fixed_abs, tag = 'smem constant byte address 0x4 - core index']
  #allocation1 [shape = 'u32[144,128]{1,0:T(1,128)}', space=vmem, size = 0x12000, scoped, tag = 'internal scratch']
  %s0 = inlined_call_operand.vmem [shape: f32[64,16], index: 0, kind: input, shape index: {}]
  %s1 = inlined_call_operand.vmem [shape: f32[16,128], index: 1, kind: input, shape index: {}]
  %s2 = inlined_call_operand.vmem [shape: f32[32,128], index: 2, kind: input, shape index: {}]
  %s3 = inlined_call_operand.vmem [shape: f32[1,128], index: 3, kind: input, shape index: {}]
  %s4 = inlined_call_operand.vmem [shape: f32[32,128], index: 4, kind: input, shape index: {}]
  %s5 = inlined_call_operand.vmem [shape: f32[1,128], index: 5, kind: input, shape index: {}]
  %s6 = inlined_call_operand.hbm [shape: f32[8,128], index: 6, kind: output, shape index: {}]
  %s7 = sld [smem:[#allocation0]]
  $region34: #{tpu_custom_call.1} parent=0
    _
  %s9 = ssub.s32 1, %s7
  %s10 = scalar_select 0, %s9, %s7
  $region1: #{tpu_custom_call.1} parent=0
    #allocation2 [shape = 'u8[4096]{0}', space=vmem, size = 0x1000, scoped, tag = 'output window, operand 0, single buffered']
    #allocation3 [shape = 's32[1]{0}', space=sflag, size = 0x4, scoped, tag = 'scoped memory for tpu_custom_call.1']
    %11 = vsyncpa [#allocation3], 0
    // Predicated region
    $region2: #{tpu_custom_call.1} parent=1 // pred_check
      _
    $region3: #{tpu_custom_call.1} parent=1 // pred_check_branch
      %13 = sbr.rel (0) target = $region5
    $region4: #{tpu_custom_call.1} parent=1 // pred_region
      _
    $region5: #{tpu_custom_call.1} parent=1 // pred_fallthru
      _
    // Predicated region
    $region6: #{tpu_custom_call.1} parent=1 // pred_check
      _
    $region7: #{tpu_custom_call.1} parent=1 // pred_check_branch
      %15 = sbr.rel (0) target = $region9
    $region8: #{tpu_custom_call.1} parent=1 // pred_region
      _
    $region9: #{tpu_custom_call.1} parent=1 // pred_fallthru
      _
    // Predicated region
    $region10: #{tpu_custom_call.1} parent=1 // pred_check
      _
    $region11: #{tpu_custom_call.1} parent=1 // pred_check_branch
      %17 = sbr.rel (0) target = $region13
    $region12: #{tpu_custom_call.1} parent=1 // pred_region
      _
    $region13: #{tpu_custom_call.1} parent=1 // pred_fallthru
      _
    // Predicated region
    $region14: #{tpu_custom_call.1} parent=1 // pred_check
      _
    $region15: #{tpu_custom_call.1} parent=1 // pred_check_branch
      %19 = sbr.rel (0) target = $region17
    $region16: #{tpu_custom_call.1} parent=1 // pred_region
      _
    $region17: #{tpu_custom_call.1} parent=1 // pred_fallthru
      _
    // Predicated region
    $region18: #{tpu_custom_call.1} parent=1 // pred_check
      _
    $region19: #{tpu_custom_call.1} parent=1 // pred_check_branch
      %21 = sbr.rel (0) target = $region21
    $region20: #{tpu_custom_call.1} parent=1 // pred_region
      _
    $region21: #{tpu_custom_call.1} parent=1 // pred_fallthru
      _
    // Predicated region
    $region22: #{tpu_custom_call.1} parent=1 // pred_check
      _
    $region23: #{tpu_custom_call.1} parent=1 // pred_check_branch
      %23 = sbr.rel (0) target = $region25
    $region24: #{tpu_custom_call.1} parent=1 // pred_region
      _
    $region25: #{tpu_custom_call.1} parent=1 // pred_fallthru
      _
    %v24 = vld [vmem:[%s0] sm:$0xff]
    %v25 = vld [vmem:[%s0 + $0x8] sm:$0xff]
    %v26 = vld [vmem:[%s0 + $0x10] sm:$0xff]
    %v27 = vld [vmem:[%s0 + $0x18] sm:$0xff]
    %v28 = vld [vmem:[%s0 + $0x20] sm:$0xff]
    %v29 = vld [vmem:[%s0 + $0x28] sm:$0xff]
    %v30 = vld [vmem:[%s0 + $0x30] sm:$0xff]
    %v31 = vld [vmem:[%s0 + $0x38] sm:$0xff]
    %v32 = vld [vmem:[%s1] sm:$0xff]
    %v33 = vld [vmem:[%s1 + $0x8] sm:$0xff]
    %v34 = vld [vmem:[%s3] sm:$0x1]
    %v36 = vlaneseq
    %v37 = vshrl.u32 %v36, 7
    %v38 = vsub.s32 0, %v37
    %v39 = vrot.slane %v34, %v38
    %vm41 = vcmask 130048
    %v43 = vsel %vm41, %v24, 0
    %v46 = vsel %vm41, %v25, 0
    %v49 = vsel %vm41, %v26, 0
    %v52 = vsel %vm41, %v27, 0
    %v55 = vsel %vm41, %v28, 0
    %v58 = vsel %vm41, %v29, 0
    %v61 = vsel %vm41, %v30, 0
    %v64 = vsel %vm41, %v31, 0
    %66 = vmatprep.subr.mxu0 0.0
    %67 = vmatpush1.msra.mxu0 %v32
    %68 = vmatprep.subr.mxu0 0.0
    %69 = vmatpush1.msra.mxu0 %v33
    %70 = vmatprep.subr.mxu0 0.0
    %71 = vmatpush1.msra.mxu0 0.0
    %72 = vmatprep.subr.mxu0 0.0
    %73 = vmatpush1.msra.mxu0 0.0
    %74 = vmatprep.subr.mxu0 0.0
    %75 = vmatpush1.msra.mxu0 0.0
    %76 = vmatprep.subr.mxu0 0.0
    %77 = vmatpush1.msra.mxu0 0.0
    %78 = vmatprep.subr.mxu0 0.0
    %79 = vmatpush1.msra.mxu0 0.0
    %80 = vmatprep.subr.mxu0 0.0
    %81 = vmatpush1.msra.mxu0 0.0
    %82 = vmatprep.subr.mxu0 0.0
    %83 = vmatpush1.msra.mxu0 0.0
    %84 = vmatprep.subr.mxu0 0.0
    %85 = vmatpush1.msra.mxu0 0.0
    %86 = vmatprep.subr.mxu0 0.0
    %87 = vmatpush1.msra.mxu0 0.0
    %88 = vmatprep.subr.mxu0 0.0
    %89 = vmatpush1.msra.mxu0 0.0
    %90 = vmatprep.subr.mxu0 0.0
    %91 = vmatpush1.msra.mxu0 0.0
    %92 = vmatprep.subr.mxu0 0.0
    %93 = vmatpush1.msra.mxu0 0.0
    %94 = vmatprep.subr.mxu0 0.0
    %95 = vmatpush1.msra.mxu0 0.0
    %96 = vmatprep.subr.mxu0 0.0
    %97 = vmatpush1.msra.mxu0 0.0
    %98 = vmatprep.subr.mxu0 0.0
    %99 = vmatpush1.msra.mxu0 0.0
    %100 = vmatprep.subr.mxu0 0.0
    %101 = vmatpush1.msra.mxu0 0.0
    %102 = vmatprep.subr.mxu0 0.0
    %103 = vmatpush1.msra.mxu0 0.0
    %104 = vmatprep.subr.mxu0 0.0
    %105 = vmatpush1.msra.mxu0 0.0
    %106 = vmatprep.subr.mxu0 0.0
    %107 = vmatpush1.msra.mxu0 0.0
    %108 = vmatprep.subr.mxu0 0.0
    %109 = vmatpush1.msra.mxu0 0.0
    %110 = vmatprep.subr.mxu0 0.0
    %111 = vmatpush1.msra.mxu0 0.0
    %112 = vmatprep.subr.mxu0 0.0
    %113 = vmatpush1.msra.mxu0 0.0
    %114 = vmatprep.subr.mxu0 0.0
    %115 = vmatpush1.msra.mxu0 0.0
    %116 = vmatprep.subr.mxu0 0.0
    %117 = vmatpush1.msra.mxu0 0.0
    %118 = vmatprep.subr.mxu0 0.0
    %119 = vmatpush1.msra.mxu0 0.0
    %120 = vmatprep.subr.mxu0 0.0
    %121 = vmatpush1.msra.mxu0 0.0
    %122 = vmatprep.subr.mxu0 0.0
    %123 = vmatpush1.msra.mxu0 0.0
    %124 = vmatprep.subr.mxu0 0.0
    %125 = vmatpush1.msra.mxu0 0.0
    %126 = vmatprep.subr.mxu0 0.0
    %127 = vmatpush1.msra.mxu0 0.0
    %128 = vmatprep.subr.mxu0 0.0
    %129 = vmatpush1.msra.mxu0 0.0
    %130 = vmatprep.mubr.f32.mxu0 0.0
    %131 = vmatmul.mubr.f32.gmra.mrb[0].mxu0 %v43
    %v132 = vpop.f32.mrb[0].mxu0
    %v133 = vadd.f32 %v39, %v132
    %v134 = vpop.f32.mrb[0].mxu0
    %135 = vmatprep.mubr.f32.mxu0 0.0
    %136 = vmatmul.mubr.f32.gmra.mrb[0].mxu0 %v46
    %v137 = vpop.f32.mrb[0].mxu0
    %v138 = vadd.f32 %v39, %v137
    %v139 = vpop.f32.mrb[0].mxu0
    %140 = vmatprep.mubr.f32.mxu0 0.0
    %141 = vmatmul.mubr.f32.gmra.mrb[0].mxu0 %v49
    %v142 = vpop.f32.mrb[0].mxu0
    %v143 = vadd.f32 %v39, %v142
    %v144 = vpop.f32.mrb[0].mxu0
    %145 = vmatprep.mubr.f32.mxu0 0.0
    %146 = vmatmul.mubr.f32.gmra.mrb[0].mxu0 %v52
    %v147 = vpop.f32.mrb[0].mxu0
    %v148 = vadd.f32 %v39, %v147
    %v149 = vpop.f32.mrb[0].mxu0
    %150 = vmatprep.mubr.f32.mxu0 0.0
    %151 = vmatmul.mubr.f32.gmra.mrb[0].mxu0 %v55
    %v152 = vpop.f32.mrb[0].mxu0
    %v153 = vadd.f32 %v39, %v152
    %v154 = vpop.f32.mrb[0].mxu0
    %155 = vmatprep.mubr.f32.mxu0 0.0
    %156 = vmatmul.mubr.f32.gmra.mrb[0].mxu0 %v58
    %v157 = vpop.f32.mrb[0].mxu0
    %v158 = vadd.f32 %v39, %v157
    %v159 = vpop.f32.mrb[0].mxu0
    %160 = vmatprep.mubr.f32.mxu0 0.0
    %161 = vmatmul.mubr.f32.gmra.mrb[0].mxu0 %v61
    %v162 = vpop.f32.mrb[0].mxu0
    %v163 = vadd.f32 %v39, %v162
    %v164 = vpop.f32.mrb[0].mxu0
    %165 = vmatprep.mubr.f32.mxu0 0.0
    %166 = vmatmul.mubr.f32.gmra.mrb[0].mxu0 %v64
    %v167 = vpop.f32.mrb[0].mxu0
    %v168 = vadd.f32 %v39, %v167
    %v169 = vpop.f32.mrb[0].mxu0
    %170 = vdwg.mxu0
    %v171 = vld [vmem:[%s2] sm:$0xff]
    %v172 = vld [vmem:[%s2 + $0x8] sm:$0xff]
    %v173 = vld [vmem:[%s2 + $0x10] sm:$0xff]
    %v174 = vld [vmem:[%s2 + $0x18] sm:$0xff]
    %vm175 = vcmask 261120
    %v177 = vsel %vm175, 0.0, 0
    %179 = vmatprep.subr.mxu0 0.0
    %180 = vmatpush1.msra.mxu0 %v171
    %181 = vmatprep.subr.mxu0 0.0
    %182 = vmatpush1.msra.mxu0 %v172
    %183 = vmatprep.subr.mxu0 0.0
    %184 = vmatpush1.msra.mxu0 %v173
    %185 = vmatprep.subr.mxu0 0.0
    %186 = vmatpush1.msra.mxu0 %v174
    %187 = vmatprep.subr.mxu0 0.0
    %188 = vmatpush1.msra.mxu0 0.0
    %189 = vmatprep.subr.mxu0 0.0
    %190 = vmatpush1.msra.mxu0 0.0
    %191 = vmatprep.subr.mxu0 0.0
    %192 = vmatpush1.msra.mxu0 0.0
    %193 = vmatprep.subr.mxu0 0.0
    %194 = vmatpush1.msra.mxu0 0.0
    %195 = vmatprep.subr.mxu0 0.0
    %196 = vmatpush1.msra.mxu0 0.0
    %197 = vmatprep.subr.mxu0 0.0
    %198 = vmatpush1.msra.mxu0 0.0
    %199 = vmatprep.subr.mxu0 0.0
    %200 = vmatpush1.msra.mxu0 0.0
    %201 = vmatprep.subr.mxu0 0.0
    %202 = vmatpush1.msra.mxu0 0.0
    %203 = vmatprep.subr.mxu0 0.0
    %204 = vmatpush1.msra.mxu0 0.0
    %205 = vmatprep.subr.mxu0 0.0
    %206 = vmatpush1.msra.mxu0 0.0
    %207 = vmatprep.subr.mxu0 0.0
    %208 = vmatpush1.msra.mxu0 0.0
    %209 = vmatprep.subr.mxu0 0.0
    %210 = vmatpush1.msra.mxu0 0.0
    %211 = vmatprep.subr.mxu0 0.0
    %212 = vmatpush1.msra.mxu0 0.0
    %213 = vmatprep.subr.mxu0 0.0
    %214 = vmatpush1.msra.mxu0 0.0
    %215 = vmatprep.subr.mxu0 0.0
    %216 = vmatpush1.msra.mxu0 0.0
    %217 = vmatprep.subr.mxu0 0.0
    %218 = vmatpush1.msra.mxu0 0.0
    %219 = vmatprep.subr.mxu0 0.0
    %220 = vmatpush1.msra.mxu0 0.0
    %221 = vmatprep.subr.mxu0 0.0
    %222 = vmatpush1.msra.mxu0 0.0
    %223 = vmatprep.subr.mxu0 0.0
    %224 = vmatpush1.msra.mxu0 0.0
    %225 = vmatprep.subr.mxu0 0.0
    %226 = vmatpush1.msra.mxu0 0.0
    %227 = vmatprep.subr.mxu0 0.0
    %228 = vmatpush1.msra.mxu0 0.0
    %229 = vmatprep.subr.mxu0 0.0
    %230 = vmatpush1.msra.mxu0 0.0
    %231 = vmatprep.subr.mxu0 0.0
    %232 = vmatpush1.msra.mxu0 0.0
    %233 = vmatprep.subr.mxu0 0.0
    %234 = vmatpush1.msra.mxu0 0.0
    %235 = vmatprep.subr.mxu0 0.0
    %236 = vmatpush1.msra.mxu0 0.0
    %237 = vmatprep.subr.mxu0 0.0
    %238 = vmatpush1.msra.mxu0 0.0
    %239 = vmatprep.subr.mxu0 0.0
    %240 = vmatpush1.msra.mxu0 0.0
    %241 = vmatprep.subr.mxu0 0.0
    %242 = vmatpush1.msra.mxu0 0.0
    %243 = vmatprep.mubr.f32.mxu0 0.0
    %244 = vmatmul.mubr.f32.gmra.mrb[0].mxu0 %v177
    %v245 = vpop.f32.mrb[0].mxu0
    %v246 = vadd.f32 0.0, %v245
    %v247 = vpop.f32.mrb[0].mxu0
    %248 = vdwg.mxu0
    %v249 = vadd.f32 %v168, %v246
    %v250 = vxor.u32 %v249, 2147483648
    %v251 = vmul.f32 %v250, 1.442695
    %v252 = vpow.pop %v251
    %v253 = vadd.f32 %v252, 1.0
    %v254 = vrcp.pop %v253
    %v255 = vmul.f32 1.0, %v254
    %v256 = vtanh.pop %v249
    %v257 = vmul.f32 %v255, 0.0
    %259 = vrot.lane.b32.xlu0 %v256, 32
    %v260 = vpop.permute.xlu0 %259
    %v262 = vmul.f32 %v255, %v260
    %264 = vrot.lane.b32.xlu0 %v262, 32
    %v265 = vpop.permute.xlu0 %264
    %v267 = vadd.f32 %v257, %v265
    %v268 = vtanh.pop %v267
    %270 = vrot.lane.b32.xlu0 %v268, 32
    %v271 = vpop.permute.xlu0 %270
    %v273 = vmul.f32 %v255, %v271
    %275 = vrot.lane.b32.xlu0 %v273, 64
    %v276 = vpop.permute.xlu0 %275
    %v277 = vsel %vm175, %v276, 0
    %279 = vmatprep.subr.mxu0 0.0
    %280 = vmatpush1.msra.mxu0 %v171
    %281 = vmatprep.subr.mxu0 0.0
    %282 = vmatpush1.msra.mxu0 %v172
    %283 = vmatprep.subr.mxu0 0.0
    %284 = vmatpush1.msra.mxu0 %v173
    %285 = vmatprep.subr.mxu0 0.0
    %286 = vmatpush1.msra.mxu0 %v174
    %287 = vmatprep.subr.mxu0 0.0
    %288 = vmatpush1.msra.mxu0 0.0
    %289 = vmatprep.subr.mxu0 0.0
    %290 = vmatpush1.msra.mxu0 0.0
    %291 = vmatprep.subr.mxu0 0.0
    %292 = vmatpush1.msra.mxu0 0.0
    %293 = vmatprep.subr.mxu0 0.0
    %294 = vmatpush1.msra.mxu0 0.0
    %295 = vmatprep.subr.mxu0 0.0
    %296 = vmatpush1.msra.mxu0 0.0
    %297 = vmatprep.subr.mxu0 0.0
    %298 = vmatpush1.msra.mxu0 0.0
    %299 = vmatprep.subr.mxu0 0.0
    %300 = vmatpush1.msra.mxu0 0.0
    %301 = vmatprep.subr.mxu0 0.0
    %302 = vmatpush1.msra.mxu0 0.0
    %303 = vmatprep.subr.mxu0 0.0
    %304 = vmatpush1.msra.mxu0 0.0
    %305 = vmatprep.subr.mxu0 0.0
    %306 = vmatpush1.msra.mxu0 0.0
    %307 = vmatprep.subr.mxu0 0.0
    %308 = vmatpush1.msra.mxu0 0.0
    %309 = vmatprep.subr.mxu0 0.0
    %310 = vmatpush1.msra.mxu0 0.0
    %311 = vmatprep.subr.mxu0 0.0
    %312 = vmatpush1.msra.mxu0 0.0
    %313 = vmatprep.subr.mxu0 0.0
    %314 = vmatpush1.msra.mxu0 0.0
    %315 = vmatprep.subr.mxu0 0.0
    %316 = vmatpush1.msra.mxu0 0.0
    %317 = vmatprep.subr.mxu0 0.0
    %318 = vmatpush1.msra.mxu0 0.0
    %319 = vmatprep.subr.mxu0 0.0
    %320 = vmatpush1.msra.mxu0 0.0
    %321 = vmatprep.subr.mxu0 0.0
    %322 = vmatpush1.msra.mxu0 0.0
    %323 = vmatprep.subr.mxu0 0.0
    %324 = vmatpush1.msra.mxu0 0.0
    %325 = vmatprep.subr.mxu0 0.0
    %326 = vmatpush1.msra.mxu0 0.0
    %327 = vmatprep.subr.mxu0 0.0
    %328 = vmatpush1.msra.mxu0 0.0
    %329 = vmatprep.subr.mxu0 0.0
    %330 = vmatpush1.msra.mxu0 0.0
    %331 = vmatprep.subr.mxu0 0.0
    %332 = vmatpush1.msra.mxu0 0.0
    %333 = vmatprep.subr.mxu0 0.0
    %334 = vmatpush1.msra.mxu0 0.0
    %335 = vmatprep.subr.mxu0 0.0
    %336 = vmatpush1.msra.mxu0 0.0
    %337 = vmatprep.subr.mxu0 0.0
    %338 = vmatpush1.msra.mxu0 0.0
    %339 = vmatprep.subr.mxu0 0.0
    %340 = vmatpush1.msra.mxu0 0.0
    %341 = vmatprep.subr.mxu0 0.0
    %342 = vmatpush1.msra.mxu0 0.0
    %343 = vmatprep.mubr.f32.mxu0 0.0
    %344 = vmatmul.mubr.f32.gmra.mrb[0].mxu0 %v277
    %v345 = vpop.f32.mrb[0].mxu0
    %v346 = vadd.f32 0.0, %v345
    %v347 = vpop.f32.mrb[0].mxu0
    %348 = vdwg.mxu0
    %v349 = vadd.f32 %v163, %v346
    %v350 = vxor.u32 %v349, 2147483648
    %v351 = vmul.f32 %v350, 1.442695
    %v352 = vpow.pop %v351
    %v353 = vadd.f32 %v352, 1.0
    %v354 = vrcp.pop %v353
    %v355 = vmul.f32 1.0, %v354
    %v356 = vtanh.pop %v349
    %v357 = vmul.f32 %v355, %v267
    %359 = vrot.lane.b32.xlu0 %v356, 32
    %v360 = vpop.permute.xlu0 %359
    %v362 = vmul.f32 %v355, %v360
    %364 = vrot.lane.b32.xlu0 %v362, 32
    %v365 = vpop.permute.xlu0 %364
    %v367 = vadd.f32 %v357, %v365
    %v368 = vtanh.pop %v367
    %370 = vrot.lane.b32.xlu0 %v368, 32
    %v371 = vpop.permute.xlu0 %370
    %v373 = vmul.f32 %v355, %v371
    %375 = vrot.lane.b32.xlu0 %v373, 64
    %v376 = vpop.permute.xlu0 %375
    %v377 = vsel %vm175, %v376, 0
    %379 = vmatprep.subr.mxu0 0.0
    %380 = vmatpush1.msra.mxu0 %v171
    %381 = vmatprep.subr.mxu0 0.0
    %382 = vmatpush1.msra.mxu0 %v172
    %383 = vmatprep.subr.mxu0 0.0
    %384 = vmatpush1.msra.mxu0 %v173
    %385 = vmatprep.subr.mxu0 0.0
    %386 = vmatpush1.msra.mxu0 %v174
    %387 = vmatprep.subr.mxu0 0.0
    %388 = vmatpush1.msra.mxu0 0.0
    %389 = vmatprep.subr.mxu0 0.0
    %390 = vmatpush1.msra.mxu0 0.0
    %391 = vmatprep.subr.mxu0 0.0
    %392 = vmatpush1.msra.mxu0 0.0
    %393 = vmatprep.subr.mxu0 0.0
    %394 = vmatpush1.msra.mxu0 0.0
    %395 = vmatprep.subr.mxu0 0.0
    %396 = vmatpush1.msra.mxu0 0.0
    %397 = vmatprep.subr.mxu0 0.0
    %398 = vmatpush1.msra.mxu0 0.0
    %399 = vmatprep.subr.mxu0 0.0
    %400 = vmatpush1.msra.mxu0 0.0
    %401 = vmatprep.subr.mxu0 0.0
    %402 = vmatpush1.msra.mxu0 0.0
    %403 = vmatprep.subr.mxu0 0.0
    %404 = vmatpush1.msra.mxu0 0.0
    %405 = vmatprep.subr.mxu0 0.0
    %406 = vmatpush1.msra.mxu0 0.0
    %407 = vmatprep.subr.mxu0 0.0
    %408 = vmatpush1.msra.mxu0 0.0
    %409 = vmatprep.subr.mxu0 0.0
    %410 = vmatpush1.msra.mxu0 0.0
    %411 = vmatprep.subr.mxu0 0.0
    %412 = vmatpush1.msra.mxu0 0.0
    %413 = vmatprep.subr.mxu0 0.0
    %414 = vmatpush1.msra.mxu0 0.0
    %415 = vmatprep.subr.mxu0 0.0
    %416 = vmatpush1.msra.mxu0 0.0
    %417 = vmatprep.subr.mxu0 0.0
    %418 = vmatpush1.msra.mxu0 0.0
    %419 = vmatprep.subr.mxu0 0.0
    %420 = vmatpush1.msra.mxu0 0.0
    %421 = vmatprep.subr.mxu0 0.0
    %422 = vmatpush1.msra.mxu0 0.0
    %423 = vmatprep.subr.mxu0 0.0
    %424 = vmatpush1.msra.mxu0 0.0
    %425 = vmatprep.subr.mxu0 0.0
    %426 = vmatpush1.msra.mxu0 0.0
    %427 = vmatprep.subr.mxu0 0.0
    %428 = vmatpush1.msra.mxu0 0.0
    %429 = vmatprep.subr.mxu0 0.0
    %430 = vmatpush1.msra.mxu0 0.0
    %431 = vmatprep.subr.mxu0 0.0
    %432 = vmatpush1.msra.mxu0 0.0
    %433 = vmatprep.subr.mxu0 0.0
    %434 = vmatpush1.msra.mxu0 0.0
    %435 = vmatprep.subr.mxu0 0.0
    %436 = vmatpush1.msra.mxu0 0.0
    %437 = vmatprep.subr.mxu0 0.0
    %438 = vmatpush1.msra.mxu0 0.0
    %439 = vmatprep.subr.mxu0 0.0
    %440 = vmatpush1.msra.mxu0 0.0
    %441 = vmatprep.subr.mxu0 0.0
    %442 = vmatpush1.msra.mxu0 0.0
    %443 = vmatprep.mubr.f32.mxu0 0.0
    %444 = vmatmul.mubr.f32.gmra.mrb[0].mxu0 %v377
    %v445 = vpop.f32.mrb[0].mxu0
    %v446 = vadd.f32 0.0, %v445
    %v447 = vpop.f32.mrb[0].mxu0
    %448 = vdwg.mxu0
    %v449 = vadd.f32 %v158, %v446
    %v450 = vxor.u32 %v449, 2147483648
    %v451 = vmul.f32 %v450, 1.442695
    %v452 = vpow.pop %v451
    %v453 = vadd.f32 %v452, 1.0
    %v454 = vrcp.pop %v453
    %v455 = vmul.f32 1.0, %v454
    %v456 = vtanh.pop %v449
    %v457 = vmul.f32 %v455, %v367
    %459 = vrot.lane.b32.xlu0 %v456, 32
    %v460 = vpop.permute.xlu0 %459
    %v462 = vmul.f32 %v455, %v460
    %464 = vrot.lane.b32.xlu0 %v462, 32
    %v465 = vpop.permute.xlu0 %464
    %v467 = vadd.f32 %v457, %v465
    %v468 = vtanh.pop %v467
    %470 = vrot.lane.b32.xlu0 %v468, 32
    %v471 = vpop.permute.xlu0 %470
    %v473 = vmul.f32 %v455, %v471
    %475 = vrot.lane.b32.xlu0 %v473, 64
    %v476 = vpop.permute.xlu0 %475
    %v477 = vsel %vm175, %v476, 0
    %479 = vmatprep.subr.mxu0 0.0
    %480 = vmatpush1.msra.mxu0 %v171
    %481 = vmatprep.subr.mxu0 0.0
    %482 = vmatpush1.msra.mxu0 %v172
    %483 = vmatprep.subr.mxu0 0.0
    %484 = vmatpush1.msra.mxu0 %v173
    %485 = vmatprep.subr.mxu0 0.0
    %486 = vmatpush1.msra.mxu0 %v174
    %487 = vmatprep.subr.mxu0 0.0
    %488 = vmatpush1.msra.mxu0 0.0
    %489 = vmatprep.subr.mxu0 0.0
    %490 = vmatpush1.msra.mxu0 0.0
    %491 = vmatprep.subr.mxu0 0.0
    %492 = vmatpush1.msra.mxu0 0.0
    %493 = vmatprep.subr.mxu0 0.0
    %494 = vmatpush1.msra.mxu0 0.0
    %495 = vmatprep.subr.mxu0 0.0
    %496 = vmatpush1.msra.mxu0 0.0
    %497 = vmatprep.subr.mxu0 0.0
    %498 = vmatpush1.msra.mxu0 0.0
    %499 = vmatprep.subr.mxu0 0.0
    %500 = vmatpush1.msra.mxu0 0.0
    %501 = vmatprep.subr.mxu0 0.0
    %502 = vmatpush1.msra.mxu0 0.0
    %503 = vmatprep.subr.mxu0 0.0
    %504 = vmatpush1.msra.mxu0 0.0
    %505 = vmatprep.subr.mxu0 0.0
    %506 = vmatpush1.msra.mxu0 0.0
    %507 = vmatprep.subr.mxu0 0.0
    %508 = vmatpush1.msra.mxu0 0.0
    %509 = vmatprep.subr.mxu0 0.0
    %510 = vmatpush1.msra.mxu0 0.0
    %511 = vmatprep.subr.mxu0 0.0
    %512 = vmatpush1.msra.mxu0 0.0
    %513 = vmatprep.subr.mxu0 0.0
    %514 = vmatpush1.msra.mxu0 0.0
    %515 = vmatprep.subr.mxu0 0.0
    %516 = vmatpush1.msra.mxu0 0.0
    %517 = vmatprep.subr.mxu0 0.0
    %518 = vmatpush1.msra.mxu0 0.0
    %519 = vmatprep.subr.mxu0 0.0
    %520 = vmatpush1.msra.mxu0 0.0
    %521 = vmatprep.subr.mxu0 0.0
    %522 = vmatpush1.msra.mxu0 0.0
    %523 = vmatprep.subr.mxu0 0.0
    %524 = vmatpush1.msra.mxu0 0.0
    %525 = vmatprep.subr.mxu0 0.0
    %526 = vmatpush1.msra.mxu0 0.0
    %527 = vmatprep.subr.mxu0 0.0
    %528 = vmatpush1.msra.mxu0 0.0
    %529 = vmatprep.subr.mxu0 0.0
    %530 = vmatpush1.msra.mxu0 0.0
    %531 = vmatprep.subr.mxu0 0.0
    %532 = vmatpush1.msra.mxu0 0.0
    %533 = vmatprep.subr.mxu0 0.0
    %534 = vmatpush1.msra.mxu0 0.0
    %535 = vmatprep.subr.mxu0 0.0
    %536 = vmatpush1.msra.mxu0 0.0
    %537 = vmatprep.subr.mxu0 0.0
    %538 = vmatpush1.msra.mxu0 0.0
    %539 = vmatprep.subr.mxu0 0.0
    %540 = vmatpush1.msra.mxu0 0.0
    %541 = vmatprep.subr.mxu0 0.0
    %542 = vmatpush1.msra.mxu0 0.0
    %543 = vmatprep.mubr.f32.mxu0 0.0
    %544 = vmatmul.mubr.f32.gmra.mrb[0].mxu0 %v477
    %v545 = vpop.f32.mrb[0].mxu0
    %v546 = vadd.f32 0.0, %v545
    %v547 = vpop.f32.mrb[0].mxu0
    %548 = vdwg.mxu0
    %v549 = vadd.f32 %v153, %v546
    %v550 = vxor.u32 %v549, 2147483648
    %v551 = vmul.f32 %v550, 1.442695
    %v552 = vpow.pop %v551
    %v553 = vadd.f32 %v552, 1.0
    %v554 = vrcp.pop %v553
    %v555 = vmul.f32 1.0, %v554
    %v556 = vtanh.pop %v549
    %v557 = vmul.f32 %v555, %v467
    %559 = vrot.lane.b32.xlu0 %v556, 32
    %v560 = vpop.permute.xlu0 %559
    %v562 = vmul.f32 %v555, %v560
    %564 = vrot.lane.b32.xlu0 %v562, 32
    %v565 = vpop.permute.xlu0 %564
    %v567 = vadd.f32 %v557, %v565
    %v568 = vtanh.pop %v567
    %570 = vrot.lane.b32.xlu0 %v568, 32
    %v571 = vpop.permute.xlu0 %570
    %v573 = vmul.f32 %v555, %v571
    %575 = vrot.lane.b32.xlu0 %v573, 64
    %v576 = vpop.permute.xlu0 %575
    %v577 = vsel %vm175, %v576, 0
    %579 = vmatprep.subr.mxu0 0.0
    %580 = vmatpush1.msra.mxu0 %v171
    %581 = vmatprep.subr.mxu0 0.0
    %582 = vmatpush1.msra.mxu0 %v172
    %583 = vmatprep.subr.mxu0 0.0
    %584 = vmatpush1.msra.mxu0 %v173
    %585 = vmatprep.subr.mxu0 0.0
    %586 = vmatpush1.msra.mxu0 %v174
    %587 = vmatprep.subr.mxu0 0.0
    %588 = vmatpush1.msra.mxu0 0.0
    %589 = vmatprep.subr.mxu0 0.0
    %590 = vmatpush1.msra.mxu0 0.0
    %591 = vmatprep.subr.mxu0 0.0
    %592 = vmatpush1.msra.mxu0 0.0
    %593 = vmatprep.subr.mxu0 0.0
    %594 = vmatpush1.msra.mxu0 0.0
    %595 = vmatprep.subr.mxu0 0.0
    %596 = vmatpush1.msra.mxu0 0.0
    %597 = vmatprep.subr.mxu0 0.0
    %598 = vmatpush1.msra.mxu0 0.0
    %599 = vmatprep.subr.mxu0 0.0
    %600 = vmatpush1.msra.mxu0 0.0
    %601 = vmatprep.subr.mxu0 0.0
    %602 = vmatpush1.msra.mxu0 0.0
    %603 = vmatprep.subr.mxu0 0.0
    %604 = vmatpush1.msra.mxu0 0.0
    %605 = vmatprep.subr.mxu0 0.0
    %606 = vmatpush1.msra.mxu0 0.0
    %607 = vmatprep.subr.mxu0 0.0
    %608 = vmatpush1.msra.mxu0 0.0
    %609 = vmatprep.subr.mxu0 0.0
    %610 = vmatpush1.msra.mxu0 0.0
    %611 = vmatprep.subr.mxu0 0.0
    %612 = vmatpush1.msra.mxu0 0.0
    %613 = vmatprep.subr.mxu0 0.0
    %614 = vmatpush1.msra.mxu0 0.0
    %615 = vmatprep.subr.mxu0 0.0
    %616 = vmatpush1.msra.mxu0 0.0
    %617 = vmatprep.subr.mxu0 0.0
    %618 = vmatpush1.msra.mxu0 0.0
    %619 = vmatprep.subr.mxu0 0.0
    %620 = vmatpush1.msra.mxu0 0.0
    %621 = vmatprep.subr.mxu0 0.0
    %622 = vmatpush1.msra.mxu0 0.0
    %623 = vmatprep.subr.mxu0 0.0
    %624 = vmatpush1.msra.mxu0 0.0
    %625 = vmatprep.subr.mxu0 0.0
    %626 = vmatpush1.msra.mxu0 0.0
    %627 = vmatprep.subr.mxu0 0.0
    %628 = vmatpush1.msra.mxu0 0.0
    %629 = vmatprep.subr.mxu0 0.0
    %630 = vmatpush1.msra.mxu0 0.0
    %631 = vmatprep.subr.mxu0 0.0
    %632 = vmatpush1.msra.mxu0 0.0
    %633 = vmatprep.subr.mxu0 0.0
    %634 = vmatpush1.msra.mxu0 0.0
    %635 = vmatprep.subr.mxu0 0.0
    %636 = vmatpush1.msra.mxu0 0.0
    %637 = vmatprep.subr.mxu0 0.0
    %638 = vmatpush1.msra.mxu0 0.0
    %639 = vmatprep.subr.mxu0 0.0
    %640 = vmatpush1.msra.mxu0 0.0
    %641 = vmatprep.subr.mxu0 0.0
    %642 = vmatpush1.msra.mxu0 0.0
    %643 = vmatprep.mubr.f32.mxu0 0.0
    %644 = vmatmul.mubr.f32.gmra.mrb[0].mxu0 %v577
    %v645 = vpop.f32.mrb[0].mxu0
    %v646 = vadd.f32 0.0, %v645
    %v647 = vpop.f32.mrb[0].mxu0
    %648 = vdwg.mxu0
    %v649 = vadd.f32 %v148, %v646
    %v650 = vxor.u32 %v649, 2147483648
    %v651 = vmul.f32 %v650, 1.442695
    %v652 = vpow.pop %v651
    %v653 = vadd.f32 %v652, 1.0
    %v654 = vrcp.pop %v653
    %v655 = vmul.f32 1.0, %v654
    %v656 = vtanh.pop %v649
    %v657 = vmul.f32 %v655, %v567
    %659 = vrot.lane.b32.xlu0 %v656, 32
    %v660 = vpop.permute.xlu0 %659
    %v662 = vmul.f32 %v655, %v660
    %664 = vrot.lane.b32.xlu0 %v662, 32
    %v665 = vpop.permute.xlu0 %664
    %v667 = vadd.f32 %v657, %v665
    %v668 = vtanh.pop %v667
    %670 = vrot.lane.b32.xlu0 %v668, 32
    %v671 = vpop.permute.xlu0 %670
    %v673 = vmul.f32 %v655, %v671
    %675 = vrot.lane.b32.xlu0 %v673, 64
    %v676 = vpop.permute.xlu0 %675
    %v677 = vsel %vm175, %v676, 0
    %679 = vmatprep.subr.mxu0 0.0
    %680 = vmatpush1.msra.mxu0 %v171
    %681 = vmatprep.subr.mxu0 0.0
    %682 = vmatpush1.msra.mxu0 %v172
    %683 = vmatprep.subr.mxu0 0.0
    %684 = vmatpush1.msra.mxu0 %v173
    %685 = vmatprep.subr.mxu0 0.0
    %686 = vmatpush1.msra.mxu0 %v174
    %687 = vmatprep.subr.mxu0 0.0
    %688 = vmatpush1.msra.mxu0 0.0
    %689 = vmatprep.subr.mxu0 0.0
    %690 = vmatpush1.msra.mxu0 0.0
    %691 = vmatprep.subr.mxu0 0.0
    %692 = vmatpush1.msra.mxu0 0.0
    %693 = vmatprep.subr.mxu0 0.0
    %694 = vmatpush1.msra.mxu0 0.0
    %695 = vmatprep.subr.mxu0 0.0
    %696 = vmatpush1.msra.mxu0 0.0
    %697 = vmatprep.subr.mxu0 0.0
    %698 = vmatpush1.msra.mxu0 0.0
    %699 = vmatprep.subr.mxu0 0.0
    %700 = vmatpush1.msra.mxu0 0.0
    %701 = vmatprep.subr.mxu0 0.0
    %702 = vmatpush1.msra.mxu0 0.0
    %703 = vmatprep.subr.mxu0 0.0
    %704 = vmatpush1.msra.mxu0 0.0
    %705 = vmatprep.subr.mxu0 0.0
    %706 = vmatpush1.msra.mxu0 0.0
    %707 = vmatprep.subr.mxu0 0.0
    %708 = vmatpush1.msra.mxu0 0.0
    %709 = vmatprep.subr.mxu0 0.0
    %710 = vmatpush1.msra.mxu0 0.0
    %711 = vmatprep.subr.mxu0 0.0
    %712 = vmatpush1.msra.mxu0 0.0
    %713 = vmatprep.subr.mxu0 0.0
    %714 = vmatpush1.msra.mxu0 0.0
    %715 = vmatprep.subr.mxu0 0.0
    %716 = vmatpush1.msra.mxu0 0.0
    %717 = vmatprep.subr.mxu0 0.0
    %718 = vmatpush1.msra.mxu0 0.0
    %719 = vmatprep.subr.mxu0 0.0
    %720 = vmatpush1.msra.mxu0 0.0
    %721 = vmatprep.subr.mxu0 0.0
    %722 = vmatpush1.msra.mxu0 0.0
    %723 = vmatprep.subr.mxu0 0.0
    %724 = vmatpush1.msra.mxu0 0.0
    %725 = vmatprep.subr.mxu0 0.0
    %726 = vmatpush1.msra.mxu0 0.0
    %727 = vmatprep.subr.mxu0 0.0
    %728 = vmatpush1.msra.mxu0 0.0
    %729 = vmatprep.subr.mxu0 0.0
    %730 = vmatpush1.msra.mxu0 0.0
    %731 = vmatprep.subr.mxu0 0.0
    %732 = vmatpush1.msra.mxu0 0.0
    %733 = vmatprep.subr.mxu0 0.0
    %734 = vmatpush1.msra.mxu0 0.0
    %735 = vmatprep.subr.mxu0 0.0
    %736 = vmatpush1.msra.mxu0 0.0
    %737 = vmatprep.subr.mxu0 0.0
    %738 = vmatpush1.msra.mxu0 0.0
    %739 = vmatprep.subr.mxu0 0.0
    %740 = vmatpush1.msra.mxu0 0.0
    %741 = vmatprep.subr.mxu0 0.0
    %742 = vmatpush1.msra.mxu0 0.0
    %743 = vmatprep.mubr.f32.mxu0 0.0
    %744 = vmatmul.mubr.f32.gmra.mrb[0].mxu0 %v677
    %v745 = vpop.f32.mrb[0].mxu0
    %v746 = vadd.f32 0.0, %v745
    %v747 = vpop.f32.mrb[0].mxu0
    %748 = vdwg.mxu0
    %v749 = vadd.f32 %v143, %v746
    %v750 = vxor.u32 %v749, 2147483648
    %v751 = vmul.f32 %v750, 1.442695
    %v752 = vpow.pop %v751
    %v753 = vadd.f32 %v752, 1.0
    %v754 = vrcp.pop %v753
    %v755 = vmul.f32 1.0, %v754
    %v756 = vtanh.pop %v749
    %v757 = vmul.f32 %v755, %v667
    %759 = vrot.lane.b32.xlu0 %v756, 32
    %v760 = vpop.permute.xlu0 %759
    %v762 = vmul.f32 %v755, %v760
    %764 = vrot.lane.b32.xlu0 %v762, 32
    %v765 = vpop.permute.xlu0 %764
    %v767 = vadd.f32 %v757, %v765
    %v768 = vtanh.pop %v767
    %770 = vrot.lane.b32.xlu0 %v768, 32
    %v771 = vpop.permute.xlu0 %770
    %v773 = vmul.f32 %v755, %v771
    %775 = vrot.lane.b32.xlu0 %v773, 64
    %v776 = vpop.permute.xlu0 %775
    %v777 = vsel %vm175, %v776, 0
    %779 = vmatprep.subr.mxu0 0.0
    %780 = vmatpush1.msra.mxu0 %v171
    %781 = vmatprep.subr.mxu0 0.0
    %782 = vmatpush1.msra.mxu0 %v172
    %783 = vmatprep.subr.mxu0 0.0
    %784 = vmatpush1.msra.mxu0 %v173
    %785 = vmatprep.subr.mxu0 0.0
    %786 = vmatpush1.msra.mxu0 %v174
    %787 = vmatprep.subr.mxu0 0.0
    %788 = vmatpush1.msra.mxu0 0.0
    %789 = vmatprep.subr.mxu0 0.0
    %790 = vmatpush1.msra.mxu0 0.0
    %791 = vmatprep.subr.mxu0 0.0
    %792 = vmatpush1.msra.mxu0 0.0
    %793 = vmatprep.subr.mxu0 0.0
    %794 = vmatpush1.msra.mxu0 0.0
    %795 = vmatprep.subr.mxu0 0.0
    %796 = vmatpush1.msra.mxu0 0.0
    %797 = vmatprep.subr.mxu0 0.0
    %798 = vmatpush1.msra.mxu0 0.0
    %799 = vmatprep.subr.mxu0 0.0
    %800 = vmatpush1.msra.mxu0 0.0
    %801 = vmatprep.subr.mxu0 0.0
    %802 = vmatpush1.msra.mxu0 0.0
    %803 = vmatprep.subr.mxu0 0.0
    %804 = vmatpush1.msra.mxu0 0.0
    %805 = vmatprep.subr.mxu0 0.0
    %806 = vmatpush1.msra.mxu0 0.0
    %807 = vmatprep.subr.mxu0 0.0
    %808 = vmatpush1.msra.mxu0 0.0
    %809 = vmatprep.subr.mxu0 0.0
    %810 = vmatpush1.msra.mxu0 0.0
    %811 = vmatprep.subr.mxu0 0.0
    %812 = vmatpush1.msra.mxu0 0.0
    %813 = vmatprep.subr.mxu0 0.0
    %814 = vmatpush1.msra.mxu0 0.0
    %815 = vmatprep.subr.mxu0 0.0
    %816 = vmatpush1.msra.mxu0 0.0
    %817 = vmatprep.subr.mxu0 0.0
    %818 = vmatpush1.msra.mxu0 0.0
    %819 = vmatprep.subr.mxu0 0.0
    %820 = vmatpush1.msra.mxu0 0.0
    %821 = vmatprep.subr.mxu0 0.0
    %822 = vmatpush1.msra.mxu0 0.0
    %823 = vmatprep.subr.mxu0 0.0
    %824 = vmatpush1.msra.mxu0 0.0
    %825 = vmatprep.subr.mxu0 0.0
    %826 = vmatpush1.msra.mxu0 0.0
    %827 = vmatprep.subr.mxu0 0.0
    %828 = vmatpush1.msra.mxu0 0.0
    %829 = vmatprep.subr.mxu0 0.0
    %830 = vmatpush1.msra.mxu0 0.0
    %831 = vmatprep.subr.mxu0 0.0
    %832 = vmatpush1.msra.mxu0 0.0
    %833 = vmatprep.subr.mxu0 0.0
    %834 = vmatpush1.msra.mxu0 0.0
    %835 = vmatprep.subr.mxu0 0.0
    %836 = vmatpush1.msra.mxu0 0.0
    %837 = vmatprep.subr.mxu0 0.0
    %838 = vmatpush1.msra.mxu0 0.0
    %839 = vmatprep.subr.mxu0 0.0
    %840 = vmatpush1.msra.mxu0 0.0
    %841 = vmatprep.subr.mxu0 0.0
    %842 = vmatpush1.msra.mxu0 0.0
    %843 = vmatprep.mubr.f32.mxu0 0.0
    %844 = vmatmul.mubr.f32.gmra.mrb[0].mxu0 %v777
    %v845 = vpop.f32.mrb[0].mxu0
    %v846 = vadd.f32 0.0, %v845
    %v847 = vpop.f32.mrb[0].mxu0
    %848 = vdwg.mxu0
    %v849 = vadd.f32 %v138, %v846
    %v850 = vxor.u32 %v849, 2147483648
    %v851 = vmul.f32 %v850, 1.442695
    %v852 = vpow.pop %v851
    %v853 = vadd.f32 %v852, 1.0
    %v854 = vrcp.pop %v853
    %v855 = vmul.f32 1.0, %v854
    %v856 = vtanh.pop %v849
    %v857 = vmul.f32 %v855, %v767
    %859 = vrot.lane.b32.xlu0 %v856, 32
    %v860 = vpop.permute.xlu0 %859
    %v862 = vmul.f32 %v855, %v860
    %864 = vrot.lane.b32.xlu0 %v862, 32
    %v865 = vpop.permute.xlu0 %864
    %v867 = vadd.f32 %v857, %v865
    %v868 = vtanh.pop %v867
    %870 = vrot.lane.b32.xlu0 %v868, 32
    %v871 = vpop.permute.xlu0 %870
    %v873 = vmul.f32 %v855, %v871
    %875 = vrot.lane.b32.xlu0 %v873, 64
    %v876 = vpop.permute.xlu0 %875
    %v877 = vsel %vm175, %v876, 0
    %879 = vmatprep.subr.mxu0 0.0
    %880 = vmatpush1.msra.mxu0 %v171
    %881 = vmatprep.subr.mxu0 0.0
    %882 = vmatpush1.msra.mxu0 %v172
    %883 = vmatprep.subr.mxu0 0.0
    %884 = vmatpush1.msra.mxu0 %v173
    %885 = vmatprep.subr.mxu0 0.0
    %886 = vmatpush1.msra.mxu0 %v174
    %887 = vmatprep.subr.mxu0 0.0
    %888 = vmatpush1.msra.mxu0 0.0
    %889 = vmatprep.subr.mxu0 0.0
    %890 = vmatpush1.msra.mxu0 0.0
    %891 = vmatprep.subr.mxu0 0.0
    %892 = vmatpush1.msra.mxu0 0.0
    %893 = vmatprep.subr.mxu0 0.0
    %894 = vmatpush1.msra.mxu0 0.0
    %895 = vmatprep.subr.mxu0 0.0
    %896 = vmatpush1.msra.mxu0 0.0
    %897 = vmatprep.subr.mxu0 0.0
    %898 = vmatpush1.msra.mxu0 0.0
    %899 = vmatprep.subr.mxu0 0.0
    %900 = vmatpush1.msra.mxu0 0.0
    %901 = vmatprep.subr.mxu0 0.0
    %902 = vmatpush1.msra.mxu0 0.0
    %903 = vmatprep.subr.mxu0 0.0
    %904 = vmatpush1.msra.mxu0 0.0
    %905 = vmatprep.subr.mxu0 0.0
    %906 = vmatpush1.msra.mxu0 0.0
    %907 = vmatprep.subr.mxu0 0.0
    %908 = vmatpush1.msra.mxu0 0.0
    %909 = vmatprep.subr.mxu0 0.0
    %910 = vmatpush1.msra.mxu0 0.0
    %911 = vmatprep.subr.mxu0 0.0
    %912 = vmatpush1.msra.mxu0 0.0
    %913 = vmatprep.subr.mxu0 0.0
    %914 = vmatpush1.msra.mxu0 0.0
    %915 = vmatprep.subr.mxu0 0.0
    %916 = vmatpush1.msra.mxu0 0.0
    %917 = vmatprep.subr.mxu0 0.0
    %918 = vmatpush1.msra.mxu0 0.0
    %919 = vmatprep.subr.mxu0 0.0
    %920 = vmatpush1.msra.mxu0 0.0
    %921 = vmatprep.subr.mxu0 0.0
    %922 = vmatpush1.msra.mxu0 0.0
    %923 = vmatprep.subr.mxu0 0.0
    %924 = vmatpush1.msra.mxu0 0.0
    %925 = vmatprep.subr.mxu0 0.0
    %926 = vmatpush1.msra.mxu0 0.0
    %927 = vmatprep.subr.mxu0 0.0
    %928 = vmatpush1.msra.mxu0 0.0
    %929 = vmatprep.subr.mxu0 0.0
    %930 = vmatpush1.msra.mxu0 0.0
    %931 = vmatprep.subr.mxu0 0.0
    %932 = vmatpush1.msra.mxu0 0.0
    %933 = vmatprep.subr.mxu0 0.0
    %934 = vmatpush1.msra.mxu0 0.0
    %935 = vmatprep.subr.mxu0 0.0
    %936 = vmatpush1.msra.mxu0 0.0
    %937 = vmatprep.subr.mxu0 0.0
    %938 = vmatpush1.msra.mxu0 0.0
    %939 = vmatprep.subr.mxu0 0.0
    %940 = vmatpush1.msra.mxu0 0.0
    %941 = vmatprep.subr.mxu0 0.0
    %942 = vmatpush1.msra.mxu0 0.0
    %943 = vmatprep.mubr.f32.mxu0 0.0
    %944 = vmatmul.mubr.f32.gmra.mrb[0].mxu0 %v877
    %v945 = vpop.f32.mrb[0].mxu0
    %v946 = vadd.f32 0.0, %v945
    %v947 = vpop.f32.mrb[0].mxu0
    %948 = vdwg.mxu0
    %v949 = vadd.f32 %v133, %v946
    %v950 = vxor.u32 %v949, 2147483648
    %v951 = vmul.f32 %v950, 1.442695
    %v952 = vpow.pop %v951
    %v953 = vadd.f32 %v952, 1.0
    %v954 = vrcp.pop %v953
    %v955 = vmul.f32 1.0, %v954
    %v956 = vtanh.pop %v949
    %v957 = vmul.f32 %v955, %v867
    %959 = vrot.lane.b32.xlu0 %v956, 32
    %v960 = vpop.permute.xlu0 %959
    %v962 = vmul.f32 %v955, %v960
    %964 = vrot.lane.b32.xlu0 %v962, 32
    %v965 = vpop.permute.xlu0 %964
    %v967 = vadd.f32 %v957, %v965
    %v968 = vtanh.pop %v967
    %970 = vrot.lane.b32.xlu0 %v968, 32
    %v971 = vpop.permute.xlu0 %970
    %v973 = vmul.f32 %v955, %v971
    %v974 = vld [vmem:[%s4] sm:$0xff]
    %v975 = vld [vmem:[%s4 + $0x8] sm:$0xff]
    %v976 = vld [vmem:[%s4 + $0x10] sm:$0xff]
    %v977 = vld [vmem:[%s4 + $0x18] sm:$0xff]
    %v978 = vld [vmem:[%s5] sm:$0x1]
    %v980 = vlaneseq
    %v981 = vshrl.u32 %v980, 7
    %v982 = vsub.s32 0, %v981
    %v983 = vrot.slane %v978, %v982
    %986 = vrot.lane.b32.xlu0 %v973, 64
    %v987 = vpop.permute.xlu0 %986
    %v988 = vsel %vm175, %v987, 0
    %990 = vmatprep.subr.mxu0 0.0
    %991 = vmatpush1.msra.mxu0 %v974
    %992 = vmatprep.subr.mxu0 0.0
    %993 = vmatpush1.msra.mxu0 %v975
    %994 = vmatprep.subr.mxu0 0.0
    %995 = vmatpush1.msra.mxu0 %v976
    %996 = vmatprep.subr.mxu0 0.0
    %997 = vmatpush1.msra.mxu0 %v977
    %998 = vmatprep.subr.mxu0 0.0
    %999 = vmatpush1.msra.mxu0 0.0
    %1000 = vmatprep.subr.mxu0 0.0
    %1001 = vmatpush1.msra.mxu0 0.0
    %1002 = vmatprep.subr.mxu0 0.0
    %1003 = vmatpush1.msra.mxu0 0.0
    %1004 = vmatprep.subr.mxu0 0.0
    %1005 = vmatpush1.msra.mxu0 0.0
    %1006 = vmatprep.subr.mxu0 0.0
    %1007 = vmatpush1.msra.mxu0 0.0
    %1008 = vmatprep.subr.mxu0 0.0
    %1009 = vmatpush1.msra.mxu0 0.0
    %1010 = vmatprep.subr.mxu0 0.0
    %1011 = vmatpush1.msra.mxu0 0.0
    %1012 = vmatprep.subr.mxu0 0.0
    %1013 = vmatpush1.msra.mxu0 0.0
    %1014 = vmatprep.subr.mxu0 0.0
    %1015 = vmatpush1.msra.mxu0 0.0
    %1016 = vmatprep.subr.mxu0 0.0
    %1017 = vmatpush1.msra.mxu0 0.0
    %1018 = vmatprep.subr.mxu0 0.0
    %1019 = vmatpush1.msra.mxu0 0.0
    %1020 = vmatprep.subr.mxu0 0.0
    %1021 = vmatpush1.msra.mxu0 0.0
    %1022 = vmatprep.subr.mxu0 0.0
    %1023 = vmatpush1.msra.mxu0 0.0
    %1024 = vmatprep.subr.mxu0 0.0
    %1025 = vmatpush1.msra.mxu0 0.0
    %1026 = vmatprep.subr.mxu0 0.0
    %1027 = vmatpush1.msra.mxu0 0.0
    %1028 = vmatprep.subr.mxu0 0.0
    %1029 = vmatpush1.msra.mxu0 0.0
    %1030 = vmatprep.subr.mxu0 0.0
    %1031 = vmatpush1.msra.mxu0 0.0
    %1032 = vmatprep.subr.mxu0 0.0
    %1033 = vmatpush1.msra.mxu0 0.0
    %1034 = vmatprep.subr.mxu0 0.0
    %1035 = vmatpush1.msra.mxu0 0.0
    %1036 = vmatprep.subr.mxu0 0.0
    %1037 = vmatpush1.msra.mxu0 0.0
    %1038 = vmatprep.subr.mxu0 0.0
    %1039 = vmatpush1.msra.mxu0 0.0
    %1040 = vmatprep.subr.mxu0 0.0
    %1041 = vmatpush1.msra.mxu0 0.0
    %1042 = vmatprep.subr.mxu0 0.0
    %1043 = vmatpush1.msra.mxu0 0.0
    %1044 = vmatprep.subr.mxu0 0.0
    %1045 = vmatpush1.msra.mxu0 0.0
    %1046 = vmatprep.subr.mxu0 0.0
    %1047 = vmatpush1.msra.mxu0 0.0
    %1048 = vmatprep.subr.mxu0 0.0
    %1049 = vmatpush1.msra.mxu0 0.0
    %1050 = vmatprep.subr.mxu0 0.0
    %1051 = vmatpush1.msra.mxu0 0.0
    %1052 = vmatprep.subr.mxu0 0.0
    %1053 = vmatpush1.msra.mxu0 0.0
    %1054 = vmatprep.mubr.f32.mxu0 0.0
    %1055 = vmatmul.mubr.f32.gmra.mrb[0].mxu0 %v988
    %v1056 = vpop.f32.mrb[0].mxu0
    %v1057 = vadd.f32 %v983, %v1056
    %v1058 = vpop.f32.mrb[0].mxu0
    %1059 = vdwg.mxu0
    %1060 = vst [vmem:[#allocation2] sm:$0xff] %v1057
    // Predicated region
    $region26: #{tpu_custom_call.1} parent=1 // pred_check
      _
    $region27: #{tpu_custom_call.1} parent=1 // pred_check_branch
      %1062 = sbr.rel (0) target = $region29
    $region28: #{tpu_custom_call.1} parent=1 // pred_region
      %s1064 = ssub.s32 128, 128
      %1065 = vsyncadd [#allocation3], %s1064
      %s1067 = sshll.u32 [#allocation2], 4
      %s1068 = int_to_ptr.vmem [resolvable:$true] %s1067
      %1070 = dma.vmem_to_hbm [thread:$0]  %s1068, 128, %s6, [#allocation3]
    $region29: #{tpu_custom_call.1} parent=1 // pred_fallthru
      _
    // Predicated region
    $region30: #{tpu_custom_call.1} parent=1 // pred_check
      _
    $region31: #{tpu_custom_call.1} parent=1 // pred_check_branch
      %1072 = sbr.rel (0) target = $region33
    $region32: #{tpu_custom_call.1} parent=1 // pred_region
      %1073 = dma.done [#allocation3], 128
    $region33: #{tpu_custom_call.1} parent=1 // pred_fallthru
      _
    %1074 = vsyncpa [#allocation3], 1

</llo_original>
